<compile_context>
chip_gen: v6e
topology: v6e:2x2x1
jax: 0.10.0
libtpu: 0.0.40
codegen_flags: <defaults>
</compile_context>

<pallas_src>
import functools

import jax
import jax.numpy as jnp
from jax import lax
from jax.experimental import pallas as pl
from jax.experimental.pallas import tpu as pltpu


def _rln_kernel(x_ref, w_ref, b_ref, m1w_ref, m1b_ref, m2w_ref, m2b_ref,
                out_ref, rescale_ref, rebias_ref,
                sum_ref, sumsq_ref, scale_ref, shift_ref,
                *, eps, n_elems):
    p = pl.program_id(1)   # phase: 0 = streaming reduction, 1 = normalize
    t = pl.program_id(2)   # spatial tile index

    # ---- phase 0: streaming reduction over HW tiles ------------------------
    @pl.when(jnp.logical_and(p == 0, t == 0))
    def _init():
        sum_ref[...] = jnp.zeros_like(sum_ref)
        sumsq_ref[...] = jnp.zeros_like(sumsq_ref)

    @pl.when(p == 0)
    def _reduce():
        x = x_ref[...].astype(jnp.float32)                 # (1, C, thw)
        sum_ref[...] = sum_ref[...] + jnp.sum(x)
        sumsq_ref[...] = sumsq_ref[...] + jnp.sum(x * x)

    # ---- phase 1 prologue: fold stats + affine into per-channel constants --
    @pl.when(jnp.logical_and(p == 1, t == 0))
    def _finalize_stats():
        inv_n = 1.0 / float(n_elems)
        mean = sum_ref[...] * inv_n                                    # (1, 1)
        # Single-pass variance E[x^2] - mean^2, accumulated in f32.
        # NOTE: mildly susceptible to cancellation when |mean| >> std.
        var = jnp.maximum(sumsq_ref[...] * inv_n - mean * mean, 0.0)   # (1, 1)
        inv_std = lax.rsqrt(var + eps)             # EUP rsqrt (free slot)
        std = (var + eps) * inv_std                # == sqrt(var + eps)

        w = w_ref[...].astype(jnp.float32)                         # (1, C, 1)
        b = b_ref[...].astype(jnp.float32)
        scale = w * inv_std
        scale_ref[...] = scale
        shift_ref[...] = b - mean * scale

        # 1x1 conv on a per-sample scalar: scalar*weight + bias, per channel.
        rescale_ref[...] = (m1w_ref[...].astype(jnp.float32) * std
                            + m1b_ref[...].astype(jnp.float32)
                            ).astype(rescale_ref.dtype)
        rebias_ref[...] = (m2w_ref[...].astype(jnp.float32) * mean
                           + m2b_ref[...].astype(jnp.float32)
                           ).astype(rebias_ref.dtype)

    # ---- phase 1: normalize + affine, one multiply-add per element ---------
    @pl.when(p == 1)
    def _normalize():
        x = x_ref[...]
        if x_ref.dtype == jnp.bfloat16:
            # v6e/v7x have bf16 VALU: keep the big elementwise math in bf16.
            out = (x * scale_ref[...].astype(jnp.bfloat16)
                   + shift_ref[...].astype(jnp.bfloat16))
        else:
            out = x.astype(jnp.float32) * scale_ref[...] + shift_ref[...]
        out_ref[...] = out.astype(out_ref.dtype)


def _choose_tile_hw(C, HW, itemsize, target_tile_bytes=2 << 20):
    """Largest spatial tile (multiple of 128 lanes, divisor of HW) whose
    (C, thw) block fits the per-buffer budget; full HW for small inputs."""
    if C * HW * itemsize <= target_tile_bytes or HW % 128 != 0:
        # TODO(synk): HW not a multiple of 128 falls back to a full-HW block
        # (no masked tail tiling implemented).
        return HW
    n_chunks = HW // 128
    best = 128
    for k in range(1, n_chunks + 1):
        if n_chunks % k == 0 and C * (k * 128) * itemsize <= target_tile_bytes:
            best = k * 128
    return best


def rln_forward(x, weight, bias, meta1_w, meta1_b, meta2_w, meta2_b,
                eps=1e-5, tile_hw=None):
    """x: (N, C, H, W). Returns (out (N,C,H,W), rescale (N,C,1,1), rebias (N,C,1,1))."""
    N, C, H, W = x.shape
    HW = H * W
    itemsize = jnp.dtype(x.dtype).itemsize

    thw = tile_hw if tile_hw is not None else _choose_tile_hw(C, HW, itemsize)
    assert HW % thw == 0, "tile_hw must divide H*W"
    assert thw == HW or thw % 128 == 0, "tile_hw must be a multiple of 128 (or H*W)"
    T = HW // thw

    x3 = x.reshape(N, C, HW)
    w3 = weight.reshape(1, C, 1)        # from torch (1, C, 1, 1)
    b3 = bias.reshape(1, C, 1)
    m1w = meta1_w.reshape(1, 1, C)      # from torch Conv2d weight (C, 1, 1, 1)
    m1b = meta1_b.reshape(1, 1, C)
    m2w = meta2_w.reshape(1, 1, C)
    m2b = meta2_b.reshape(1, 1, C)

    kernel = functools.partial(_rln_kernel, eps=eps, n_elems=C * HW)

    # Explicit scoped-VMEM budget: 2x double-buffered input + output tiles,
    # params and scratch, plus slack.  Capped well below v7x's 64 MiB physical.
    tile_bytes = C * thw * itemsize
    vmem_limit = int(min(48 << 20, max(16 << 20, 8 * tile_bytes + (4 << 20))))

    out3, rescale3, rebias3 = pl.pallas_call(
        kernel,
        out_shape=(
            jax.ShapeDtypeStruct((N, C, HW), x.dtype),
            jax.ShapeDtypeStruct((N, 1, C), x.dtype),
            jax.ShapeDtypeStruct((N, 1, C), x.dtype),
        ),
        grid_spec=pltpu.PrefetchScalarGridSpec(
            num_scalar_prefetch=0,
            grid=(N, 2, T),
            in_specs=[
                pl.BlockSpec((1, C, thw), lambda n, p, t: (n, 0, t)),   # x tile
                pl.BlockSpec((1, C, 1), lambda n, p, t: (0, 0, 0)),     # weight
                pl.BlockSpec((1, C, 1), lambda n, p, t: (0, 0, 0)),     # bias
                pl.BlockSpec((1, 1, C), lambda n, p, t: (0, 0, 0)),     # meta1 w
                pl.BlockSpec((1, 1, C), lambda n, p, t: (0, 0, 0)),     # meta1 b
                pl.BlockSpec((1, 1, C), lambda n, p, t: (0, 0, 0)),     # meta2 w
                pl.BlockSpec((1, 1, C), lambda n, p, t: (0, 0, 0)),     # meta2 b
            ],
            out_specs=[
                # During the reduce phase (p=0) the output index stays pinned to
                # tile 0 so no writebacks of untouched buffers happen; phase 1
                # walks the tiles and writes tile 0 first, so every output block
                # is written exactly once before its writeback.
                pl.BlockSpec((1, C, thw), lambda n, p, t: (n, 0, p * t)),
                pl.BlockSpec((1, 1, C), lambda n, p, t: (n, 0, 0)),
                pl.BlockSpec((1, 1, C), lambda n, p, t: (n, 0, 0)),
            ],
            scratch_shapes=[
                pltpu.VMEM((1, 1), jnp.float32),     # running sum
                pltpu.VMEM((1, 1), jnp.float32),     # running sum of squares
                pltpu.VMEM((1, C, 1), jnp.float32),  # folded per-channel scale
                pltpu.VMEM((1, C, 1), jnp.float32),  # folded per-channel shift
            ],
        ),
        compiler_params=pltpu.CompilerParams(
            dimension_semantics=("parallel", "arbitrary", "arbitrary"),
            vmem_limit_bytes=vmem_limit,
        ),
    )(x3, w3, b3, m1w, m1b, m2w, m2b)

    out = out3.reshape(N, C, H, W)
    rescale = rescale3.reshape(N, C, 1, 1)
    rebias = rebias3.reshape(N, C, 1, 1)
    return out, rescale, rebias


def _reference(x, weight, bias, meta1_w, meta1_b, meta2_w, meta2_b, eps=1e-5):
    mean = jnp.mean(x, axis=(1, 2, 3), keepdims=True)
    std = jnp.sqrt(jnp.mean((x - mean) ** 2, axis=(1, 2, 3), keepdims=True) + eps)
    normed = (x - mean) / std
    out = normed * weight.reshape(1, -1, 1, 1) + bias.reshape(1, -1, 1, 1)
    C = weight.size
    rescale = std * meta1_w.reshape(1, C, 1, 1) + meta1_b.reshape(1, C, 1, 1)
    rebias = mean * meta2_w.reshape(1, C, 1, 1) + meta2_b.reshape(1, C, 1, 1)
    return out, rescale, rebias


if __name__ == "__main__":
    N, C, H, W = 2, 4, 16, 16
    eps = 1e-5

    key = jax.random.PRNGKey(0)
    kx, k1, k2 = jax.random.split(key, 3)

    x = jax.random.normal(kx, (N, C, H, W), dtype=jnp.float32)

    # deterministic parameter init mirroring the PyTorch __init__
    weight = jnp.ones((1, C, 1, 1), dtype=jnp.float32)            # nn.Parameter ones
    bias = jnp.zeros((1, C, 1, 1), dtype=jnp.float32)             # nn.Parameter zeros
    meta1_w = 0.02 * jax.random.truncated_normal(k1, -2.0, 2.0, (C, 1, 1, 1), jnp.float32)
    meta1_b = jnp.ones((C,), dtype=jnp.float32)                   # constant_(1)
    meta2_w = 0.02 * jax.random.truncated_normal(k2, -2.0, 2.0, (C, 1, 1, 1), jnp.float32)
    meta2_b = jnp.zeros((C,), dtype=jnp.float32)                  # constant_(0)

    ref_out, ref_rescale, ref_rebias = _reference(x, weight, bias,
                                                  meta1_w, meta1_b, meta2_w, meta2_b, eps)

    # 1) Explicit spatial tiling (HW=256 split into two 128-lane tiles):
    #    exercises the two-phase streaming reduction + folded affine path.
    out, rescale, rebias = rln_forward(x, weight, bias,
                                       meta1_w, meta1_b, meta2_w, meta2_b,
                                       eps, tile_hw=128)
    jax.block_until_ready((out, rescale, rebias))
    assert jnp.allclose(out, ref_out, atol=2e-5, rtol=1e-5)
    assert jnp.allclose(rescale, ref_rescale, atol=1e-5, rtol=1e-5)
    assert jnp.allclose(rebias, ref_rebias, atol=1e-5, rtol=1e-5)

    # 2) Auto-chosen tile (whole sample for this toy size).
    out2, rescale2, rebias2 = rln_forward(x, weight, bias,
                                          meta1_w, meta1_b, meta2_w, meta2_b, eps)
    jax.block_until_ready((out2, rescale2, rebias2))
    assert jnp.allclose(out2, ref_out, atol=2e-5, rtol=1e-5)
    assert jnp.allclose(rescale2, ref_rescale, atol=1e-5, rtol=1e-5)
    assert jnp.allclose(rebias2, ref_rebias, atol=1e-5, rtol=1e-5)

    print("KERNEL_OK")
</pallas_src>

<mosaic_0001>
module attributes {stable_mosaic.version = 11 : i64} {
  func.func @_rln_kernel(%arg0: i32, %arg1: i32, %arg2: i32, %arg3: memref<1x4x128xf32, #tpu.memory_space<vmem>>, %arg4: memref<1x4x1xf32, #tpu.memory_space<vmem>>, %arg5: memref<1x4x1xf32, #tpu.memory_space<vmem>>, %arg6: memref<1x1x4xf32, #tpu.memory_space<vmem>>, %arg7: memref<1x1x4xf32, #tpu.memory_space<vmem>>, %arg8: memref<1x1x4xf32, #tpu.memory_space<vmem>>, %arg9: memref<1x1x4xf32, #tpu.memory_space<vmem>>, %arg10: memref<1x4x128xf32, #tpu.memory_space<vmem>>, %arg11: memref<1x1x4xf32, #tpu.memory_space<vmem>>, %arg12: memref<1x1x4xf32, #tpu.memory_space<vmem>>, %arg13: memref<1x1xf32, #tpu.memory_space<vmem>>, %arg14: memref<1x1xf32, #tpu.memory_space<vmem>>, %arg15: memref<1x4x1xf32, #tpu.memory_space<vmem>>, %arg16: memref<1x4x1xf32, #tpu.memory_space<vmem>>) attributes {dimension_semantics = [#tpu.dimension_semantics<parallel>, #tpu.dimension_semantics<arbitrary>, #tpu.dimension_semantics<arbitrary>], iteration_bounds = array<i64: 2, 2, 2>, scalar_prefetch = 0 : i64, scratch_operands = 4 : i64, tpu.core_type = #tpu.core_type<tc>, window_params = [{transform_indices = @transform_0, window_bounds = array<i64: 1, 4, 128>}, {pipeline_mode = #tpu.pipeline_mode<synchronous>, transform_indices = @transform_1, window_bounds = array<i64: 1, 4, 1>}, {pipeline_mode = #tpu.pipeline_mode<synchronous>, transform_indices = @transform_2, window_bounds = array<i64: 1, 4, 1>}, {pipeline_mode = #tpu.pipeline_mode<synchronous>, transform_indices = @transform_3, window_bounds = array<i64: 1, 1, 4>}, {pipeline_mode = #tpu.pipeline_mode<synchronous>, transform_indices = @transform_4, window_bounds = array<i64: 1, 1, 4>}, {pipeline_mode = #tpu.pipeline_mode<synchronous>, transform_indices = @transform_5, window_bounds = array<i64: 1, 1, 4>}, {pipeline_mode = #tpu.pipeline_mode<synchronous>, transform_indices = @transform_6, window_bounds = array<i64: 1, 1, 4>}, {transform_indices = @transform_7, window_bounds = array<i64: 1, 4, 128>}, {transform_indices = @transform_8, window_bounds = array<i64: 1, 1, 4>}, {transform_indices = @transform_9, window_bounds = array<i64: 1, 1, 4>}]} {
    %c0_i32 = arith.constant 0 : i32
    %0 = arith.cmpi eq, %arg1, %c0_i32 : i32
    %c0_i32_0 = arith.constant 0 : i32
    %1 = arith.cmpi eq, %arg2, %c0_i32_0 : i32
    %2 = arith.andi %0, %1 : i1
    %3 = arith.extui %2 : i1 to i32
    %c0_i32_1 = arith.constant 0 : i32
    %4 = arith.cmpi ne, %3, %c0_i32_1 : i32
    scf.if %4 {
      %cst = arith.constant 0.000000e+00 : f32
      %16 = vector.broadcast %cst : f32 to vector<1x1xf32>
      %c0 = arith.constant 0 : index
      %c0_8 = arith.constant 0 : index
      %17 = vector.load %arg13[%c0, %c0_8] : memref<1x1xf32, #tpu.memory_space<vmem>>, vector<1x1xf32>
      tpu.vector_store %arg13[%c0, %c0_8], %16 {strides = array<i32>} : memref<1x1xf32, #tpu.memory_space<vmem>>, vector<1x1xf32>,
      %cst_9 = arith.constant 0.000000e+00 : f32
      %18 = vector.broadcast %cst_9 : f32 to vector<1x1xf32>
      %c0_10 = arith.constant 0 : index
      %c0_11 = arith.constant 0 : index
      %19 = vector.load %arg14[%c0_10, %c0_11] : memref<1x1xf32, #tpu.memory_space<vmem>>, vector<1x1xf32>
      tpu.vector_store %arg14[%c0_10, %c0_11], %18 {strides = array<i32>} : memref<1x1xf32, #tpu.memory_space<vmem>>, vector<1x1xf32>,
    } else {
    }
    %c0_i32_2 = arith.constant 0 : i32
    %5 = arith.cmpi eq, %arg1, %c0_i32_2 : i32
    %6 = arith.extui %5 : i1 to i32
    %c0_i32_3 = arith.constant 0 : i32
    %7 = arith.cmpi ne, %6, %c0_i32_3 : i32
    scf.if %7 {
      %c0 = arith.constant 0 : index
      %c0_8 = arith.constant 0 : index
      %c0_9 = arith.constant 0 : index
      %16 = vector.load %arg3[%c0, %c0_8, %c0_9] : memref<1x4x128xf32, #tpu.memory_space<vmem>>, vector<1x4x128xf32>
      %c0_10 = arith.constant 0 : index
      %c0_11 = arith.constant 0 : index
      %17 = vector.load %arg13[%c0_10, %c0_11] : memref<1x1xf32, #tpu.memory_space<vmem>>, vector<1x1xf32>
      %18 = vector.shape_cast %16 : vector<1x4x128xf32> to vector<1x1x4x128xf32>
      %cst = arith.constant dense<0.000000e+00> : vector<1xf32>
      %19 = vector.multi_reduction <add>, %18, %cst [1, 2, 3] : vector<1x1x4x128xf32> to vector<1xf32>
      %20 = vector.shape_cast %19 : vector<1xf32> to vector<1x1x1x1xf32>
      %21 = vector.extract %20[0, 0, 0, 0] : f32 from vector<1x1x1x1xf32>
      %22 = vector.broadcast %21 : f32 to vector<1x1xf32>
      %23 = arith.addf %17, %22 : vector<1x1xf32>
      %c0_12 = arith.constant 0 : index
      %c0_13 = arith.constant 0 : index
      %24 = vector.load %arg13[%c0_12, %c0_13] : memref<1x1xf32, #tpu.memory_space<vmem>>, vector<1x1xf32>
      tpu.vector_store %arg13[%c0_12, %c0_13], %23 {strides = array<i32>} : memref<1x1xf32, #tpu.memory_space<vmem>>, vector<1x1xf32>,
      %c0_14 = arith.constant 0 : index
      %c0_15 = arith.constant 0 : index
      %25 = vector.load %arg14[%c0_14, %c0_15] : memref<1x1xf32, #tpu.memory_space<vmem>>, vector<1x1xf32>
      %26 = arith.mulf %16, %16 : vector<1x4x128xf32>
      %27 = vector.shape_cast %26 : vector<1x4x128xf32> to vector<1x1x4x128xf32>
      %cst_16 = arith.constant dense<0.000000e+00> : vector<1xf32>
      %28 = vector.multi_reduction <add>, %27, %cst_16 [1, 2, 3] : vector<1x1x4x128xf32> to vector<1xf32>
      %29 = vector.shape_cast %28 : vector<1xf32> to vector<1x1x1x1xf32>
      %30 = vector.extract %29[0, 0, 0, 0] : f32 from vector<1x1x1x1xf32>
      %31 = vector.broadcast %30 : f32 to vector<1x1xf32>
      %32 = arith.addf %25, %31 : vector<1x1xf32>
      %c0_17 = arith.constant 0 : index
      %c0_18 = arith.constant 0 : index
      %33 = vector.load %arg14[%c0_17, %c0_18] : memref<1x1xf32, #tpu.memory_space<vmem>>, vector<1x1xf32>
      tpu.vector_store %arg14[%c0_17, %c0_18], %32 {strides = array<i32>} : memref<1x1xf32, #tpu.memory_space<vmem>>, vector<1x1xf32>,
    } else {
    }
    %c1_i32 = arith.constant 1 : i32
    %8 = arith.cmpi eq, %arg1, %c1_i32 : i32
    %c0_i32_4 = arith.constant 0 : i32
    %9 = arith.cmpi eq, %arg2, %c0_i32_4 : i32
    %10 = arith.andi %8, %9 : i1
    %11 = arith.extui %10 : i1 to i32
    %c0_i32_5 = arith.constant 0 : i32
    %12 = arith.cmpi ne, %11, %c0_i32_5 : i32
    scf.if %12 {
      %c0 = arith.constant 0 : index
      %c0_8 = arith.constant 0 : index
      %16 = vector.load %arg13[%c0, %c0_8] : memref<1x1xf32, #tpu.memory_space<vmem>>, vector<1x1xf32>
      %cst = arith.constant 9.765625E-4 : f32
      %17 = vector.broadcast %cst : f32 to vector<1x1xf32>
      %18 = arith.mulf %16, %17 : vector<1x1xf32>
      %c0_9 = arith.constant 0 : index
      %c0_10 = arith.constant 0 : index
      %19 = vector.load %arg14[%c0_9, %c0_10] : memref<1x1xf32, #tpu.memory_space<vmem>>, vector<1x1xf32>
      %cst_11 = arith.constant 9.765625E-4 : f32
      %20 = vector.broadcast %cst_11 : f32 to vector<1x1xf32>
      %21 = arith.mulf %19, %20 : vector<1x1xf32>
      %22 = arith.mulf %18, %18 : vector<1x1xf32>
      %23 = arith.subf %21, %22 : vector<1x1xf32>
      %cst_12 = arith.constant 0.000000e+00 : f32
      %24 = vector.broadcast %cst_12 : f32 to vector<1x1xf32>
      %25 = arith.maximumf %23, %24 : vector<1x1xf32>
      %cst_13 = arith.constant 9.99999974E-6 : f32
      %26 = vector.broadcast %cst_13 : f32 to vector<1x1xf32>
      %27 = arith.addf %25, %26 : vector<1x1xf32>
      %28 = math.rsqrt %27 : vector<1x1xf32>
      %cst_14 = arith.constant 9.99999974E-6 : f32
      %29 = vector.broadcast %cst_14 : f32 to vector<1x1xf32>
      %30 = arith.addf %25, %29 : vector<1x1xf32>
      %31 = arith.mulf %30, %28 : vector<1x1xf32>
      %c0_15 = arith.constant 0 : index
      %c0_16 = arith.constant 0 : index
      %c0_17 = arith.constant 0 : index
      %32 = vector.load %arg4[%c0_15, %c0_16, %c0_17] : memref<1x4x1xf32, #tpu.memory_space<vmem>>, vector<1x4x1xf32>
      %c0_18 = arith.constant 0 : index
      %c0_19 = arith.constant 0 : index
      %c0_20 = arith.constant 0 : index
      %33 = vector.load %arg5[%c0_18, %c0_19, %c0_20] : memref<1x4x1xf32, #tpu.memory_space<vmem>>, vector<1x4x1xf32>
      %34 = vector.shape_cast %28 : vector<1x1xf32> to vector<1x1x1xf32>
      %35 = vector.broadcast %34 : vector<1x1x1xf32> to vector<1x4x1xf32>
      %36 = arith.mulf %32, %35 : vector<1x4x1xf32>
      %c0_21 = arith.constant 0 : index
      %c0_22 = arith.constant 0 : index
      %c0_23 = arith.constant 0 : index
      %37 = vector.load %arg15[%c0_21, %c0_22, %c0_23] : memref<1x4x1xf32, #tpu.memory_space<vmem>>, vector<1x4x1xf32>
      tpu.vector_store %arg15[%c0_21, %c0_22, %c0_23], %36 {strides = array<i32>} : memref<1x4x1xf32, #tpu.memory_space<vmem>>, vector<1x4x1xf32>,
      %38 = vector.shape_cast %18 : vector<1x1xf32> to vector<1x1x1xf32>
      %39 = vector.broadcast %38 : vector<1x1x1xf32> to vector<1x4x1xf32>
      %40 = arith.mulf %39, %36 : vector<1x4x1xf32>
      %41 = arith.subf %33, %40 : vector<1x4x1xf32>
      %c0_24 = arith.constant 0 : index
      %c0_25 = arith.constant 0 : index
      %c0_26 = arith.constant 0 : index
      %42 = vector.load %arg16[%c0_24, %c0_25, %c0_26] : memref<1x4x1xf32, #tpu.memory_space<vmem>>, vector<1x4x1xf32>
      tpu.vector_store %arg16[%c0_24, %c0_25, %c0_26], %41 {strides = array<i32>} : memref<1x4x1xf32, #tpu.memory_space<vmem>>, vector<1x4x1xf32>,
      %c0_27 = arith.constant 0 : index
      %c0_28 = arith.constant 0 : index
      %c0_29 = arith.constant 0 : index
      %43 = vector.load %arg6[%c0_27, %c0_28, %c0_29] : memref<1x1x4xf32, #tpu.memory_space<vmem>>, vector<1x1x4xf32>
      %44 = vector.shape_cast %31 : vector<1x1xf32> to vector<1x1x1xf32>
      %45 = vector.broadcast %44 : vector<1x1x1xf32> to vector<1x1x4xf32>
      %46 = arith.mulf %43, %45 : vector<1x1x4xf32>
      %c0_30 = arith.constant 0 : index
      %c0_31 = arith.constant 0 : index
      %c0_32 = arith.constant 0 : index
      %47 = vector.load %arg7[%c0_30, %c0_31, %c0_32] : memref<1x1x4xf32, #tpu.memory_space<vmem>>, vector<1x1x4xf32>
      %48 = arith.addf %46, %47 : vector<1x1x4xf32>
      %c0_33 = arith.constant 0 : index
      %c0_34 = arith.constant 0 : index
      %c0_35 = arith.constant 0 : index
      %49 = vector.load %arg11[%c0_33, %c0_34, %c0_35] : memref<1x1x4xf32, #tpu.memory_space<vmem>>, vector<1x1x4xf32>
      tpu.vector_store %arg11[%c0_33, %c0_34, %c0_35], %48 {strides = array<i32>} : memref<1x1x4xf32, #tpu.memory_space<vmem>>, vector<1x1x4xf32>,
      %c0_36 = arith.constant 0 : index
      %c0_37 = arith.constant 0 : index
      %c0_38 = arith.constant 0 : index
      %50 = vector.load %arg8[%c0_36, %c0_37, %c0_38] : memref<1x1x4xf32, #tpu.memory_space<vmem>>, vector<1x1x4xf32>
      %51 = vector.shape_cast %18 : vector<1x1xf32> to vector<1x1x1xf32>
      %52 = vector.broadcast %51 : vector<1x1x1xf32> to vector<1x1x4xf32>
      %53 = arith.mulf %50, %52 : vector<1x1x4xf32>
      %c0_39 = arith.constant 0 : index
      %c0_40 = arith.constant 0 : index
      %c0_41 = arith.constant 0 : index
      %54 = vector.load %arg9[%c0_39, %c0_40, %c0_41] : memref<1x1x4xf32, #tpu.memory_space<vmem>>, vector<1x1x4xf32>
      %55 = arith.addf %53, %54 : vector<1x1x4xf32>
      %c0_42 = arith.constant 0 : index
      %c0_43 = arith.constant 0 : index
      %c0_44 = arith.constant 0 : index
      %56 = vector.load %arg12[%c0_42, %c0_43, %c0_44] : memref<1x1x4xf32, #tpu.memory_space<vmem>>, vector<1x1x4xf32>
      tpu.vector_store %arg12[%c0_42, %c0_43, %c0_44], %55 {strides = array<i32>} : memref<1x1x4xf32, #tpu.memory_space<vmem>>, vector<1x1x4xf32>,
    } else {
    }
    %c1_i32_6 = arith.constant 1 : i32
    %13 = arith.cmpi eq, %arg1, %c1_i32_6 : i32
    %14 = arith.extui %13 : i1 to i32
    %c0_i32_7 = arith.constant 0 : i32
    %15 = arith.cmpi ne, %14, %c0_i32_7 : i32
    scf.if %15 {
      %c0 = arith.constant 0 : index
      %c0_8 = arith.constant 0 : index
      %c0_9 = arith.constant 0 : index
      %16 = vector.load %arg3[%c0, %c0_8, %c0_9] : memref<1x4x128xf32, #tpu.memory_space<vmem>>, vector<1x4x128xf32>
      %c0_10 = arith.constant 0 : index
      %c0_11 = arith.constant 0 : index
      %c0_12 = arith.constant 0 : index
      %17 = vector.load %arg15[%c0_10, %c0_11, %c0_12] : memref<1x4x1xf32, #tpu.memory_space<vmem>>, vector<1x4x1xf32>
      %18 = vector.broadcast %17 : vector<1x4x1xf32> to vector<1x4x128xf32>
      %19 = arith.mulf %16, %18 : vector<1x4x128xf32>
      %c0_13 = arith.constant 0 : index
      %c0_14 = arith.constant 0 : index
      %c0_15 = arith.constant 0 : index
      %20 = vector.load %arg16[%c0_13, %c0_14, %c0_15] : memref<1x4x1xf32, #tpu.memory_space<vmem>>, vector<1x4x1xf32>
      %21 = vector.broadcast %20 : vector<1x4x1xf32> to vector<1x4x128xf32>
      %22 = arith.addf %19, %21 : vector<1x4x128xf32>
      %c0_16 = arith.constant 0 : index
      %c0_17 = arith.constant 0 : index
      %c0_18 = arith.constant 0 : index
      %23 = vector.load %arg10[%c0_16, %c0_17, %c0_18] : memref<1x4x128xf32, #tpu.memory_space<vmem>>, vector<1x4x128xf32>
      tpu.vector_store %arg10[%c0_16, %c0_17, %c0_18], %22 {strides = array<i32>} : memref<1x4x128xf32, #tpu.memory_space<vmem>>, vector<1x4x128xf32>,
    } else {
    }
    return
  }
  func.func @transform_0(%arg0: i32, %arg1: i32, %arg2: i32) -> (i32, i32, i32) {
    %c0_i32 = arith.constant 0 : i32
    %c0_i32_0 = arith.constant 0 : i32
    return %arg0, %c0_i32, %arg2 : i32, i32, i32
  }
  func.func @transform_1(%arg0: i32, %arg1: i32, %arg2: i32) -> (i32, i32, i32) {
    %c0_i32 = arith.constant 0 : i32
    %c0_i32_0 = arith.constant 0 : i32
    %c0_i32_1 = arith.constant 0 : i32
    %c0_i32_2 = arith.constant 0 : i32
    return %c0_i32, %c0_i32_0, %c0_i32_1 : i32, i32, i32
  }
  func.func @transform_2(%arg0: i32, %arg1: i32, %arg2: i32) -> (i32, i32, i32) {
    %c0_i32 = arith.constant 0 : i32
    %c0_i32_0 = arith.constant 0 : i32
    %c0_i32_1 = arith.constant 0 : i32
    %c0_i32_2 = arith.constant 0 : i32
    return %c0_i32, %c0_i32_0, %c0_i32_1 : i32, i32, i32
  }
  func.func @transform_3(%arg0: i32, %arg1: i32, %arg2: i32) -> (i32, i32, i32) {
    %c0_i32 = arith.constant 0 : i32
    %c0_i32_0 = arith.constant 0 : i32
    %c0_i32_1 = arith.constant 0 : i32
    %c0_i32_2 = arith.constant 0 : i32
    return %c0_i32, %c0_i32_0, %c0_i32_1 : i32, i32, i32
  }
  func.func @transform_4(%arg0: i32, %arg1: i32, %arg2: i32) -> (i32, i32, i32) {
    %c0_i32 = arith.constant 0 : i32
    %c0_i32_0 = arith.constant 0 : i32
    %c0_i32_1 = arith.constant 0 : i32
    %c0_i32_2 = arith.constant 0 : i32
    return %c0_i32, %c0_i32_0, %c0_i32_1 : i32, i32, i32
  }
  func.func @transform_5(%arg0: i32, %arg1: i32, %arg2: i32) -> (i32, i32, i32) {
    %c0_i32 = arith.constant 0 : i32
    %c0_i32_0 = arith.constant 0 : i32
    %c0_i32_1 = arith.constant 0 : i32
    %c0_i32_2 = arith.constant 0 : i32
    return %c0_i32, %c0_i32_0, %c0_i32_1 : i32, i32, i32
  }
  func.func @transform_6(%arg0: i32, %arg1: i32, %arg2: i32) -> (i32, i32, i32) {
    %c0_i32 = arith.constant 0 : i32
    %c0_i32_0 = arith.constant 0 : i32
    %c0_i32_1 = arith.constant 0 : i32
    %c0_i32_2 = arith.constant 0 : i32
    return %c0_i32, %c0_i32_0, %c0_i32_1 : i32, i32, i32
  }
  func.func @transform_7(%arg0: i32, %arg1: i32, %arg2: i32) -> (i32, i32, i32) {
    %0 = arith.muli %arg1, %arg2 : i32
    %c0_i32 = arith.constant 0 : i32
    %c0_i32_0 = arith.constant 0 : i32
    return %arg0, %c0_i32, %0 : i32, i32, i32
  }
  func.func @transform_8(%arg0: i32, %arg1: i32, %arg2: i32) -> (i32, i32, i32) {
    %c0_i32 = arith.constant 0 : i32
    %c0_i32_0 = arith.constant 0 : i32
    %c0_i32_1 = arith.constant 0 : i32
    return %arg0, %c0_i32, %c0_i32_0 : i32, i32, i32
  }
  func.func @transform_9(%arg0: i32, %arg1: i32, %arg2: i32) -> (i32, i32, i32) {
    %c0_i32 = arith.constant 0 : i32
    %c0_i32_0 = arith.constant 0 : i32
    %c0_i32_1 = arith.constant 0 : i32
    return %arg0, %c0_i32, %c0_i32_0 : i32, i32, i32
  }
}

</mosaic_0001>

<llo_original>
// kernel: tpu_custom_call.1
$region0: #{tpu_custom_call.1}
  #allocation0 [shape = 'u32[]', space=smem, size = 0x4, offset = 0x4, fixed_abs, tag = 'smem constant byte address 0x4 - core index']
  #allocation1 [shape = 'u32[144,128]{1,0:T(1,128)}', space=vmem, size = 0x12000, scoped, tag = 'internal scratch']
  #allocation2 [shape = 'f32[1,1]{1,0:T(1,128)}', space=vmem, size = 0x200, scoped, tag = 'scratch operand']
  #allocation3 [shape = 'f32[1,1]{1,0:T(1,128)}', space=vmem, size = 0x200, scoped, tag = 'scratch operand']
  #allocation4 [shape = 'f32[1,4,1]{2,1,0:T(4,128)}', space=vmem, size = 0x800, scoped, tag = 'scratch operand']
  #allocation5 [shape = 'f32[1,4,1]{2,1,0:T(4,128)}', space=vmem, size = 0x800, scoped, tag = 'scratch operand']
  %s0 = inlined_call_operand.hbm [shape: f32[2,4,256], index: 0, kind: input, shape index: {}]
  %s1 = inlined_call_operand.vmem [shape: f32[1,4,1], index: 1, kind: input, shape index: {}]
  %s2 = inlined_call_operand.vmem [shape: f32[1,4,1], index: 2, kind: input, shape index: {}]
  %s3 = inlined_call_operand.vmem [shape: f32[1,1,4], index: 3, kind: input, shape index: {}]
  %s4 = inlined_call_operand.vmem [shape: f32[1,1,4], index: 4, kind: input, shape index: {}]
  %s5 = inlined_call_operand.vmem [shape: f32[1,1,4], index: 5, kind: input, shape index: {}]
  %s6 = inlined_call_operand.vmem [shape: f32[1,1,4], index: 6, kind: input, shape index: {}]
  %s7 = inlined_call_operand.hbm [shape: f32[2,4,256], index: 7, kind: output, shape index: {0}]
  %s8 = inlined_call_operand.hbm [shape: f32[2,1,4], index: 8, kind: output, shape index: {1}]
  %s9 = inlined_call_operand.hbm [shape: f32[2,1,4], index: 9, kind: output, shape index: {2}]
  %10 = xla_tuple %s7, %s8, %s9
  %s11 = sld [smem:[#allocation0]]
  $region97: #{tpu_custom_call.1} parent=0
    _
  %s13 = ssub.s32 1, %s11
  %s14 = scalar_select 0, %s13, %s11
  $region1: #{tpu_custom_call.1} parent=0
    #allocation6 [shape = 'u8[4096]{0}', space=vmem, size = 0x1000, scoped, tag = 'input window, operand 0']
    #allocation7 [shape = 's32[2]{0}', space=sflag, size = 0x8, scoped, tag = 'scoped memory for tpu_custom_call.1']
    #allocation8 [shape = 's32[2]{0}', space=sflag, size = 0x8, scoped, tag = 'scoped memory for tpu_custom_call.1']
    #allocation9 [shape = 'u8[4096]{0}', space=vmem, size = 0x1000, scoped, tag = 'output window, operand 0']
    #allocation10 [shape = 'u8[1024]{0}', space=vmem, size = 0x400, scoped, tag = 'output window, operand 1']
    #allocation11 [shape = 's32[2]{0}', space=sflag, size = 0x8, scoped, tag = 'scoped memory for tpu_custom_call.1']
    #allocation12 [shape = 'u8[1024]{0}', space=vmem, size = 0x400, scoped, tag = 'output window, operand 2']
    %15 = vsyncpa [#allocation7], 0
    %s16 = scalar_lea.sflag [#allocation7], 1
    %17 = vsyncpa %s16, 0
    %18 = vsyncpa [#allocation8], 0
    %s19 = scalar_lea.sflag [#allocation8], 1
    %20 = vsyncpa %s19, 0
    %21 = vsyncpa [#allocation11], 0
    %s22 = scalar_lea.sflag [#allocation11], 1
    %23 = vsyncpa %s22, 0
    loop: start=0, step=1, limit=10
    $region2: #{tpu_custom_call.1} parent=1 // loop_pre_header
      _
    $region3: #{tpu_custom_call.1} parent=1 // loop_header
      %s25 = sphi 0, %s29
      %p26 = scmp.ge.s32.totalorder %s25, 10
      %s32 = sphi 0, %s51
      %s33 = sphi 0, %s47
      %s34 = sphi 0, %s43
      %s35 = sphi 0, %s32
      %s36 = sphi 0, %s33
      %s37 = sphi 0, %s34
      %s38 = sphi 0, %s35
      %s39 = sphi 0, %s36
      %s40 = sphi 0, %s37
      %s56 = sphi 0, %s58
      %s59 = sphi 0, %s56
      %s60 = sphi 0, %s59
      %s76 = sphi 0, %s60
      %s80 = sphi 0, %s80
      %s82 = sphi 0, %s80
      %s83 = sphi 0, %s82
      %s97 = sphi 0, %s83
      %s101 = sphi 0, %s101
      %s103 = sphi 0, %s101
      %s104 = sphi 0, %s103
      %s118 = sphi 0, %s104
      %s122 = sphi 0, %s122
      %s124 = sphi 0, %s122
      %s125 = sphi 0, %s124
      %s139 = sphi 0, %s125
      %s143 = sphi 0, %s143
      %s145 = sphi 0, %s143
      %s146 = sphi 0, %s145
      %s160 = sphi 0, %s146
      %s164 = sphi 0, %s164
      %s166 = sphi 0, %s164
      %s167 = sphi 0, %s166
      %s181 = sphi 0, %s167
      %s185 = sphi 0, %s185
      %s187 = sphi 0, %s185
      %s188 = sphi 0, %s187
      %s202 = sphi 0, %s188
      %s212 = sphi 0, %s214
      %s215 = sphi 0, %s212
      %s216 = sphi 0, %s215
      %s232 = sphi 0, %s216
      %s238 = sphi 0, %s240
      %s241 = sphi 0, %s238
      %s242 = sphi 0, %s241
      %s258 = sphi 0, %s242
      %s264 = sphi 0, %s266
      %s267 = sphi 0, %s264
      %s268 = sphi 0, %s267
      %s284 = sphi 0, %s268
    $region4: #{tpu_custom_call.1} parent=1 // loop_header_branch
      %28 = sbr.rel (%p26) target = $region8
    $region5: #{tpu_custom_call.1} parent=1 // loop_body
      %s30 = ssub.s32 %s25, 1
      %s31 = ssub.s32 %s25, 2
      %s41 = sadd.s32 1, %s34
      %p42 = scmp.ge.s32.totalorder %s41, 2
      %s43 = scalar_select %p42, 0, %s41
      %s44 = sadd.s32 1, %s33
      %s45 = scalar_select %p42, %s44, %s33
      %p46 = scmp.ge.s32.totalorder %s45, 2
      %s47 = scalar_select %p46, 0, %s45
      %s48 = sadd.s32 1, %s32
      %s49 = scalar_select %p46, %s48, %s32
      %p50 = scmp.ge.s32.totalorder %s49, 2
      %s51 = scalar_select %p50, 0, %s49
      %s52 = ssub.s32 %s32, %s51
      %s53 = ssub.s32 %s34, %s43
      %s54 = sor.u32 %s52, %s53
      %p55 = scmp.eq.s32.totalorder %s54, 0
      %s57 = sadd.s32 %s56, 1
      %s58 = scalar_select %p55, %s56, %s57
      %p61 = pneg %p55
      %p62 = scmp.eq.s32.totalorder %s25, 7
      %p63 = por %p61, %p62
      %p64 = scmp.ne.s32.totalorder %s56, %s59
      %p65 = scmp.eq.s32.totalorder %s25, 0
      %p66 = por %p64, %p65
      %p67 = scmp.ne.s32.totalorder %s56, %s59
      %p68 = scmp.eq.s32.totalorder %s30, 7
      %p69 = por %p67, %p68
      %p70 = scmp.ne.s32.totalorder %s59, %s60
      %p71 = scmp.eq.s32.totalorder %s30, 0
      %p72 = por %p70, %p71
      %p73 = scmp.ne.s32.totalorder %s59, %s60
      %p74 = scmp.eq.s32.totalorder %s31, 7
      %p75 = por %p73, %p74
      %p77 = scmp.ne.s32.totalorder %s60, %s76
      %p78 = scmp.eq.s32.totalorder %s31, 0
      %p79 = por %p77, %p78
      %s81 = sadd.s32 %s80, 1
      %p84 = scmp.eq.s32.totalorder %s25, 7
      %p85 = scmp.ne.s32.totalorder %s80, %s82
      %p86 = scmp.eq.s32.totalorder %s25, 0
      %p87 = por %p85, %p86
      %p88 = scmp.ne.s32.totalorder %s80, %s82
      %p89 = scmp.eq.s32.totalorder %s30, 7
      %p90 = por %p88, %p89
      %p91 = scmp.ne.s32.totalorder %s82, %s83
      %p92 = scmp.eq.s32.totalorder %s30, 0
      %p93 = por %p91, %p92
      %p94 = scmp.ne.s32.totalorder %s82, %s83
      %p95 = scmp.eq.s32.totalorder %s31, 7
      %p96 = por %p94, %p95
      %p98 = scmp.ne.s32.totalorder %s83, %s97
      %p99 = scmp.eq.s32.totalorder %s31, 0
      %p100 = por %p98, %p99
      %s102 = sadd.s32 %s101, 1
      %p105 = scmp.eq.s32.totalorder %s25, 7
      %p106 = scmp.ne.s32.totalorder %s101, %s103
      %p107 = scmp.eq.s32.totalorder %s25, 0
      %p108 = por %p106, %p107
      %p109 = scmp.ne.s32.totalorder %s101, %s103
      %p110 = scmp.eq.s32.totalorder %s30, 7
      %p111 = por %p109, %p110
      %p112 = scmp.ne.s32.totalorder %s103, %s104
      %p113 = scmp.eq.s32.totalorder %s30, 0
      %p114 = por %p112, %p113
      %p115 = scmp.ne.s32.totalorder %s103, %s104
      %p116 = scmp.eq.s32.totalorder %s31, 7
      %p117 = por %p115, %p116
      %p119 = scmp.ne.s32.totalorder %s104, %s118
      %p120 = scmp.eq.s32.totalorder %s31, 0
      %p121 = por %p119, %p120
      %s123 = sadd.s32 %s122, 1
      %p126 = scmp.eq.s32.totalorder %s25, 7
      %p127 = scmp.ne.s32.totalorder %s122, %s124
      %p128 = scmp.eq.s32.totalorder %s25, 0
      %p129 = por %p127, %p128
      %p130 = scmp.ne.s32.totalorder %s122, %s124
      %p131 = scmp.eq.s32.totalorder %s30, 7
      %p132 = por %p130, %p131
      %p133 = scmp.ne.s32.totalorder %s124, %s125
      %p134 = scmp.eq.s32.totalorder %s30, 0
      %p135 = por %p133, %p134
      %p136 = scmp.ne.s32.totalorder %s124, %s125
      %p137 = scmp.eq.s32.totalorder %s31, 7
      %p138 = por %p136, %p137
      %p140 = scmp.ne.s32.totalorder %s125, %s139
      %p141 = scmp.eq.s32.totalorder %s31, 0
      %p142 = por %p140, %p141
      %s144 = sadd.s32 %s143, 1
      %p147 = scmp.eq.s32.totalorder %s25, 7
      %p148 = scmp.ne.s32.totalorder %s143, %s145
      %p149 = scmp.eq.s32.totalorder %s25, 0
      %p150 = por %p148, %p149
      %p151 = scmp.ne.s32.totalorder %s143, %s145
      %p152 = scmp.eq.s32.totalorder %s30, 7
      %p153 = por %p151, %p152
      %p154 = scmp.ne.s32.totalorder %s145, %s146
      %p155 = scmp.eq.s32.totalorder %s30, 0
      %p156 = por %p154, %p155
      %p157 = scmp.ne.s32.totalorder %s145, %s146
      %p158 = scmp.eq.s32.totalorder %s31, 7
      %p159 = por %p157, %p158
      %p161 = scmp.ne.s32.totalorder %s146, %s160
      %p162 = scmp.eq.s32.totalorder %s31, 0
      %p163 = por %p161, %p162
      %s165 = sadd.s32 %s164, 1
      %p168 = scmp.eq.s32.totalorder %s25, 7
      %p169 = scmp.ne.s32.totalorder %s164, %s166
      %p170 = scmp.eq.s32.totalorder %s25, 0
      %p171 = por %p169, %p170
      %p172 = scmp.ne.s32.totalorder %s164, %s166
      %p173 = scmp.eq.s32.totalorder %s30, 7
      %p174 = por %p172, %p173
      %p175 = scmp.ne.s32.totalorder %s166, %s167
      %p176 = scmp.eq.s32.totalorder %s30, 0
      %p177 = por %p175, %p176
      %p178 = scmp.ne.s32.totalorder %s166, %s167
      %p179 = scmp.eq.s32.totalorder %s31, 7
      %p180 = por %p178, %p179
      %p182 = scmp.ne.s32.totalorder %s167, %s181
      %p183 = scmp.eq.s32.totalorder %s31, 0
      %p184 = por %p182, %p183
      %s186 = sadd.s32 %s185, 1
      %p189 = scmp.eq.s32.totalorder %s25, 7
      %p190 = scmp.ne.s32.totalorder %s185, %s187
      %p191 = scmp.eq.s32.totalorder %s25, 0
      %p192 = por %p190, %p191
      %p193 = scmp.ne.s32.totalorder %s185, %s187
      %p194 = scmp.eq.s32.totalorder %s30, 7
      %p195 = por %p193, %p194
      %p196 = scmp.ne.s32.totalorder %s187, %s188
      %p197 = scmp.eq.s32.totalorder %s30, 0
      %p198 = por %p196, %p197
      %p199 = scmp.ne.s32.totalorder %s187, %s188
      %p200 = scmp.eq.s32.totalorder %s31, 7
      %p201 = por %p199, %p200
      %p203 = scmp.ne.s32.totalorder %s188, %s202
      %p204 = scmp.eq.s32.totalorder %s31, 0
      %p205 = por %p203, %p204
      %s206 = smul.u32 %s33, %s34
      %s207 = smul.u32 %s47, %s43
      %s208 = ssub.s32 %s32, %s51
      %s209 = ssub.s32 %s206, %s207
      %s210 = sor.u32 %s208, %s209
      %p211 = scmp.eq.s32.totalorder %s210, 0
      %s213 = sadd.s32 %s212, 1
      %s214 = scalar_select %p211, %s212, %s213
      %p217 = pneg %p211
      %p218 = scmp.eq.s32.totalorder %s25, 7
      %p219 = por %p217, %p218
      %p220 = scmp.ne.s32.totalorder %s212, %s215
      %p221 = scmp.eq.s32.totalorder %s25, 0
      %p222 = por %p220, %p221
      %p223 = scmp.ne.s32.totalorder %s212, %s215
      %p224 = scmp.eq.s32.totalorder %s30, 7
      %p225 = por %p223, %p224
      %p226 = scmp.ne.s32.totalorder %s215, %s216
      %p227 = scmp.eq.s32.totalorder %s30, 0
      %p228 = por %p226, %p227
      %p229 = scmp.ne.s32.totalorder %s215, %s216
      %p230 = scmp.eq.s32.totalorder %s31, 7
      %p231 = por %p229, %p230
      %p233 = scmp.ne.s32.totalorder %s216, %s232
      %p234 = scmp.eq.s32.totalorder %s31, 0
      %p235 = por %p233, %p234
      %s236 = ssub.s32 %s32, %s51
      %p237 = scmp.eq.s32.totalorder %s236, 0
      %s239 = sadd.s32 %s238, 1
      %s240 = scalar_select %p237, %s238, %s239
      %p243 = pneg %p237
      %p244 = scmp.eq.s32.totalorder %s25, 7
      %p245 = por %p243, %p244
      %p246 = scmp.ne.s32.totalorder %s238, %s241
      %p247 = scmp.eq.s32.totalorder %s25, 0
      %p248 = por %p246, %p247
      %p249 = scmp.ne.s32.totalorder %s238, %s241
      %p250 = scmp.eq.s32.totalorder %s30, 7
      %p251 = por %p249, %p250
      %p252 = scmp.ne.s32.totalorder %s241, %s242
      %p253 = scmp.eq.s32.totalorder %s30, 0
      %p254 = por %p252, %p253
      %p255 = scmp.ne.s32.totalorder %s241, %s242
      %p256 = scmp.eq.s32.totalorder %s31, 7
      %p257 = por %p255, %p256
      %p259 = scmp.ne.s32.totalorder %s242, %s258
      %p260 = scmp.eq.s32.totalorder %s31, 0
      %p261 = por %p259, %p260
      %s262 = ssub.s32 %s32, %s51
      %p263 = scmp.eq.s32.totalorder %s262, 0
      %s265 = sadd.s32 %s264, 1
      %s266 = scalar_select %p263, %s264, %s265
      %p269 = pneg %p263
      %p270 = scmp.eq.s32.totalorder %s25, 7
      %p271 = por %p269, %p270
      %p272 = scmp.ne.s32.totalorder %s264, %s267
      %p273 = scmp.eq.s32.totalorder %s25, 0
      %p274 = por %p272, %p273
      %p275 = scmp.ne.s32.totalorder %s264, %s267
      %p276 = scmp.eq.s32.totalorder %s30, 7
      %p277 = por %p275, %p276
      %p278 = scmp.ne.s32.totalorder %s267, %s268
      %p279 = scmp.eq.s32.totalorder %s30, 0
      %p280 = por %p278, %p279
      %p281 = scmp.ne.s32.totalorder %s267, %s268
      %p282 = scmp.eq.s32.totalorder %s31, 7
      %p283 = por %p281, %p282
      %p285 = scmp.ne.s32.totalorder %s268, %s284
      %p286 = scmp.eq.s32.totalorder %s31, 0
      %p287 = por %p285, %p286
      %p288 = scmp.le.s32.totalorder 1, %s25
      %p289 = scmp.lt.s32.totalorder %s25, 9
      %p290 = pnand %p288, %p289
      %p291 = pneg %p290
      // Predicated region
      $region9: #{tpu_custom_call.1} parent=5 // pred_check
        _
      $region10: #{tpu_custom_call.1} parent=5 // pred_check_branch
        %293 = sbr.rel (%p290) target = $region12
      $region11: #{tpu_custom_call.1} parent=5 // pred_region
        %s294 = ssub.s32 %s25, 1
        // Predicated region
        $region13: #{tpu_custom_call.1} parent=11 // pred_check
          %p295 = pneg %p93
        $region14: #{tpu_custom_call.1} parent=11 // pred_check_branch
          %297 = sbr.rel (%p295) target = $region16
        $region15: #{tpu_custom_call.1} parent=11 // pred_region
          _
        $region16: #{tpu_custom_call.1} parent=11 // pred_fallthru
          _
        // Predicated region
        $region17: #{tpu_custom_call.1} parent=11 // pred_check
          %p298 = pneg %p114
        $region18: #{tpu_custom_call.1} parent=11 // pred_check_branch
          %300 = sbr.rel (%p298) target = $region20
        $region19: #{tpu_custom_call.1} parent=11 // pred_region
          _
        $region20: #{tpu_custom_call.1} parent=11 // pred_fallthru
          _
        // Predicated region
        $region21: #{tpu_custom_call.1} parent=11 // pred_check
          %p301 = pneg %p135
        $region22: #{tpu_custom_call.1} parent=11 // pred_check_branch
          %303 = sbr.rel (%p301) target = $region24
        $region23: #{tpu_custom_call.1} parent=11 // pred_region
          _
        $region24: #{tpu_custom_call.1} parent=11 // pred_fallthru
          _
        // Predicated region
        $region25: #{tpu_custom_call.1} parent=11 // pred_check
          %p304 = pneg %p156
        $region26: #{tpu_custom_call.1} parent=11 // pred_check_branch
          %306 = sbr.rel (%p304) target = $region28
        $region27: #{tpu_custom_call.1} parent=11 // pred_region
          _
        $region28: #{tpu_custom_call.1} parent=11 // pred_fallthru
          _
        // Predicated region
        $region29: #{tpu_custom_call.1} parent=11 // pred_check
          %p307 = pneg %p177
        $region30: #{tpu_custom_call.1} parent=11 // pred_check_branch
          %309 = sbr.rel (%p307) target = $region32
        $region31: #{tpu_custom_call.1} parent=11 // pred_region
          _
        $region32: #{tpu_custom_call.1} parent=11 // pred_fallthru
          _
        // Predicated region
        $region33: #{tpu_custom_call.1} parent=11 // pred_check
          %p310 = pneg %p198
        $region34: #{tpu_custom_call.1} parent=11 // pred_check_branch
          %312 = sbr.rel (%p310) target = $region36
        $region35: #{tpu_custom_call.1} parent=11 // pred_region
          _
        $region36: #{tpu_custom_call.1} parent=11 // pred_fallthru
          _
      $region12: #{tpu_custom_call.1} parent=5 // pred_fallthru
        _
      %p313 = scmp.lt.s32.totalorder %s25, 8
      // Predicated region
      $region37: #{tpu_custom_call.1} parent=5 // pred_check
        %p314 = pneg %p313
      $region38: #{tpu_custom_call.1} parent=5 // pred_check_branch
        %316 = sbr.rel (%p314) target = $region40
      $region39: #{tpu_custom_call.1} parent=5 // pred_region
        // Predicated region
        $region41: #{tpu_custom_call.1} parent=39 // pred_check
          %p317 = pneg %p66
        $region42: #{tpu_custom_call.1} parent=39 // pred_check_branch
          %319 = sbr.rel (%p317) target = $region44
        $region43: #{tpu_custom_call.1} parent=39 // pred_region
          %s320 = sand.u32 %s56, 1
          %s321 = scalar_lea.sflag [#allocation7], %s320
          %s322 = sand.u32 %s56, 1
          %s323 = smul.addr %s322, 4
          %s324 = scalar_lea.vmem [#allocation6], %s323
          %s326 = ssub.s32 64, 64
          %327 = vsyncadd %s321, %s326
          %s328 = smul.addr %s32, 2
          %s329 = sadd.s32 %s34, %s328
          %s330 = smul.addr %s329, 64
          %s331 = scalar_lea.hbm %s0, %s330
          %s333 = sshll.u32 %s324, 4
          %s334 = int_to_ptr.vmem [resolvable:$true] %s333
          %336 = dma.hbm_to_vmem [thread:$0]  %s331, 64, %s334, %s321
        $region44: #{tpu_custom_call.1} parent=39 // pred_fallthru
          _
      $region40: #{tpu_custom_call.1} parent=5 // pred_fallthru
        _
      %p337 = scmp.le.s32.totalorder 1, %s25
      %p338 = scmp.lt.s32.totalorder %s25, 9
      %p339 = pnand %p337, %p338
      %p340 = pneg %p339
      // Predicated region
      $region45: #{tpu_custom_call.1} parent=5 // pred_check
        _
      $region46: #{tpu_custom_call.1} parent=5 // pred_check_branch
        %342 = sbr.rel (%p339) target = $region48
      $region47: #{tpu_custom_call.1} parent=5 // pred_region
        %s343 = ssub.s32 %s25, 1
        %s344 = sand.u32 %s59, 1
        %s345 = scalar_lea.sflag [#allocation7], %s344
        %s346 = sand.u32 %s59, 1
        %s347 = smul.addr %s346, 4
        %s348 = scalar_lea.vmem [#allocation6], %s347
        // Predicated region
        $region49: #{tpu_custom_call.1} parent=47 // pred_check
          %p349 = pneg %p72
        $region50: #{tpu_custom_call.1} parent=47 // pred_check_branch
          %351 = sbr.rel (%p349) target = $region52
        $region51: #{tpu_custom_call.1} parent=47 // pred_region
          %352 = dma.done %s345, 64
        $region52: #{tpu_custom_call.1} parent=47 // pred_fallthru
          _
        %s353 = sand.u32 %s59, 1
        %s354 = scalar_lea.sflag [#allocation7], %s353
        %s355 = sand.u32 %s59, 1
        %s356 = smul.addr %s355, 4
        %s357 = scalar_lea.vmem [#allocation6], %s356
        %p358 = pneg %p72
        %p359 = pneg %p69
        %p360 = pneg %p93
        %p361 = pneg %p90
        %p362 = pneg %p114
        %p363 = pneg %p111
        %p364 = pneg %p135
        %p365 = pneg %p132
        %p366 = pneg %p156
        %p367 = pneg %p153
        %p368 = pneg %p177
        %p369 = pneg %p174
        %p370 = pneg %p198
        %p371 = pneg %p195
        %p372 = pneg %p228
        %p373 = pneg %p225
        %s374 = sand.u32 %s215, 1
        %s375 = scalar_lea.sflag [#allocation8], %s374
        %s376 = sand.u32 %s215, 1
        %s377 = smul.addr %s376, 4
        %s378 = scalar_lea.vmem [#allocation9], %s377
        %p379 = pneg %p254
        %p380 = pneg %p251
        %s381 = sand.u32 %s30, 1
        %s382 = scalar_lea.sflag [#allocation11], %s381
        %s383 = sand.u32 %s241, 1
        %s384 = scalar_lea.vmem [#allocation10], %s383
        %p385 = pneg %p280
        %p386 = pneg %p277
        %s387 = sand.u32 %s30, 1
        %s388 = scalar_lea.sflag [#allocation11], %s387
        %s389 = sand.u32 %s267, 1
        %s390 = scalar_lea.vmem [#allocation12], %s389
        %s391 = smul.u32 %s36, %s37
        %p392 = scmp.eq.s32.totalorder %s36, 0
        %p393 = scmp.eq.s32.totalorder %s37, 0
        %p394 = pnand %p392, %p393
        %p395 = pneg %p394
        // Predicated region
        $region53: #{tpu_custom_call.1} parent=47 // pred_check
          _
        $region54: #{tpu_custom_call.1} parent=47 // pred_check_branch
          %397 = sbr.rel (%p394) target = $region56
        $region55: #{tpu_custom_call.1} parent=47 // pred_region
          %vm398 = vcmask 0
          %399 = vst.msk [vmem:[#allocation2] sm:$0x1] %vm398, 0.0
          %400 = vst.msk [vmem:[#allocation3] sm:$0x1] %vm398, 0.0
        $region56: #{tpu_custom_call.1} parent=47 // pred_fallthru
          _
        // Predicated region
        $region57: #{tpu_custom_call.1} parent=47 // pred_check
          %p401 = pneg %p392
        $region58: #{tpu_custom_call.1} parent=47 // pred_check_branch
          %403 = sbr.rel (%p401) target = $region60
        $region59: #{tpu_custom_call.1} parent=47 // pred_region
          %v404 = vld [vmem:[%s348] sm:$0xf]
          %v405 = vld [vmem:[#allocation2] sm:$0x1]
          %vm406 = vcmask 1043456
          %v407 = vsel %vm406, %v404, 0.0
          %408 = vadd.xlane.f32.xlu0 %v407
          %v409 = vpop.xlane.xlu0 %408
          %v410 = vrot.slane %v409, 4
          %v411 = vadd.f32 %v409, %v410
          %v412 = vrot.slane %v411, 2
          %v413 = vadd.f32 %v411, %v412
          %v414 = vrot.slane %v413, 1
          %v415 = vadd.f32 %v413, %v414
          %s416 = vtos %v415
          %v417 = vstv %s416
          %v418 = vadd.f32 %v405, %v417
          %vm419 = vcmask 0
          %420 = vst.msk [vmem:[#allocation2] sm:$0x1] %vm419, %v418
          %v421 = vld [vmem:[#allocation3] sm:$0x1]
          %v422 = vmul.f32 %v404, %v404
          %v423 = vsel %vm406, %v422, 0.0
          %424 = vadd.xlane.f32.xlu0 %v423
          %v425 = vpop.xlane.xlu0 %424
          %v426 = vrot.slane %v425, 4
          %v427 = vadd.f32 %v425, %v426
          %v428 = vrot.slane %v427, 2
          %v429 = vadd.f32 %v427, %v428
          %v430 = vrot.slane %v429, 1
          %v431 = vadd.f32 %v429, %v430
          %s432 = vtos %v431
          %v433 = vstv %s432
          %v434 = vadd.f32 %v421, %v433
          %435 = vst.msk [vmem:[#allocation3] sm:$0x1] %vm419, %v434
        $region60: #{tpu_custom_call.1} parent=47 // pred_fallthru
          _
        %p436 = scmp.eq.s32.totalorder %s36, 1
        %p437 = pnand %p436, %p393
        %p438 = pneg %p437
        // Predicated region
        $region61: #{tpu_custom_call.1} parent=47 // pred_check
          _
        $region62: #{tpu_custom_call.1} parent=47 // pred_check_branch
          %440 = sbr.rel (%p437) target = $region64
        $region63: #{tpu_custom_call.1} parent=47 // pred_region
          %v441 = vld [vmem:[#allocation2] sm:$0x1]
          %v442 = vmul.f32 %v441, 0.0009765625
          %v443 = vld [vmem:[#allocation3] sm:$0x1]
          %v444 = vmul.f32 %v443, 0.0009765625
          %v445 = vmul.f32 %v442, %v442
          %v446 = vsub.f32 %v444, %v445
          %v447 = vmax.f32 %v446, 0.0
          %v448 = vadd.f32 %v447, 1e-05
          %v449 = vrsqrt.pop %v448
          %v450 = vmul.f32 %v448, %v449
          %v451 = vld [vmem:[%s1] sm:$0xf]
          %v452 = vld [vmem:[%s2] sm:$0xf]
          %v454 = vlaneseq
          %v455 = vshrl.u32 %v454, 7
          %v456 = vsub.s32 0, %v455
          %v457 = vrot.slane %v449, %v456
          %v459 = vmul.f32 %v451, %v457
          %vm460 = vcmask 3072
          %461 = vst.msk [vmem:[#allocation4] sm:$0xf] %vm460, %v459
          %v463 = vlaneseq
          %v464 = vshrl.u32 %v463, 7
          %v465 = vsub.s32 0, %v464
          %v466 = vrot.slane %v442, %v465
          %v468 = vmul.f32 %v466, %v459
          %v469 = vsub.f32 %v452, %v468
          %470 = vst.msk [vmem:[#allocation5] sm:$0xf] %vm460, %v469
          %v471 = vld [vmem:[%s3] sm:$0x1]
          %473 = vset.pattern.permute.xlu0 0
          %474 = vperm.xlu0 %473, %v450
          %v475 = vpop.permute.xlu0 %474
          %v477 = vlaneseq
          %v478 = vshrl.u32 %v477, 7
          %v479 = vsub.s32 0, %v478
          %v480 = vrot.slane %v475, %v479
          %v481 = vmul.f32 %v471, %v480
          %v482 = vld [vmem:[%s4] sm:$0x1]
          %v483 = vadd.f32 %v481, %v482
          %vm484 = vcmask 24576
          %485 = vst.msk [vmem:[%s384] sm:$0x1] %vm484, %v483
          %v486 = vld [vmem:[%s5] sm:$0x1]
          %487 = vset.pattern.permute.xlu0 0
          %488 = vperm.xlu0 %487, %v442
          %v489 = vpop.permute.xlu0 %488
          %v491 = vlaneseq
          %v492 = vshrl.u32 %v491, 7
          %v493 = vsub.s32 0, %v492
          %v494 = vrot.slane %v489, %v493
          %v495 = vmul.f32 %v486, %v494
          %v496 = vld [vmem:[%s6] sm:$0x1]
          %v497 = vadd.f32 %v495, %v496
          %498 = vst.msk [vmem:[%s390] sm:$0x1] %vm484, %v497
        $region64: #{tpu_custom_call.1} parent=47 // pred_fallthru
          _
        // Predicated region
        $region65: #{tpu_custom_call.1} parent=47 // pred_check
          %p499 = pneg %p436
        $region66: #{tpu_custom_call.1} parent=47 // pred_check_branch
          %501 = sbr.rel (%p499) target = $region68
        $region67: #{tpu_custom_call.1} parent=47 // pred_region
          %v502 = vld [vmem:[%s348] sm:$0xf]
          %v503 = vld [vmem:[#allocation4] sm:$0xf]
          %505 = vset.pattern.permute.xlu0 0
          %506 = vperm.xlu0 %505, %v503
          %v507 = vpop.permute.xlu0 %506
          %v509 = vmul.f32 %v502, %v507
          %v510 = vld [vmem:[#allocation5] sm:$0xf]
          %512 = vset.pattern.permute.xlu0 0
          %513 = vperm.xlu0 %512, %v510
          %v514 = vpop.permute.xlu0 %513
          %v516 = vadd.f32 %v509, %v514
          %517 = vst [vmem:[%s378] sm:$0xf] %v516
        $region68: #{tpu_custom_call.1} parent=47 // pred_fallthru
          _
        %s518 = sand.u32 %s215, 1
        %s519 = scalar_lea.sflag [#allocation8], %s518
        %s520 = sand.u32 %s215, 1
        %s521 = smul.addr %s520, 4
        %s522 = scalar_lea.vmem [#allocation9], %s521
        %s523 = sand.u32 %s30, 1
        %s524 = scalar_lea.sflag [#allocation11], %s523
        %s525 = sand.u32 %s241, 1
        %s526 = scalar_lea.vmem [#allocation10], %s525
        %s527 = sand.u32 %s30, 1
        %s528 = scalar_lea.sflag [#allocation11], %s527
        %s529 = sand.u32 %s267, 1
        %s530 = scalar_lea.vmem [#allocation12], %s529
        // Predicated region
        $region69: #{tpu_custom_call.1} parent=47 // pred_check
          %p531 = pneg %p225
        $region70: #{tpu_custom_call.1} parent=47 // pred_check_branch
          %533 = sbr.rel (%p531) target = $region72
        $region71: #{tpu_custom_call.1} parent=47 // pred_region
          %s534 = smul.u32 %s36, %s37
          %s536 = ssub.s32 64, 64
          %537 = vsyncadd %s519, %s536
          %s538 = smul.addr %s35, 2
          %s539 = sadd.s32 %s534, %s538
          %s540 = smul.addr %s539, 64
          %s541 = scalar_lea.hbm %s7, %s540
          %s543 = sshll.u32 %s522, 4
          %s544 = int_to_ptr.vmem [resolvable:$true] %s543
          %546 = dma.vmem_to_hbm [thread:$0]  %s544, 64, %s541, %s519
        $region72: #{tpu_custom_call.1} parent=47 // pred_fallthru
          _
        // Predicated region
        $region73: #{tpu_custom_call.1} parent=47 // pred_check
          %p547 = pneg %p251
        $region74: #{tpu_custom_call.1} parent=47 // pred_check_branch
          %549 = sbr.rel (%p547) target = $region76
        $region75: #{tpu_custom_call.1} parent=47 // pred_region
          %s551 = ssub.s32 16, 16
          %552 = vsyncadd %s524, %s551
          %s553 = smul.addr %s35, 16
          %s554 = scalar_lea.hbm %s8, %s553
          %s556 = sshll.u32 %s526, 4
          %s557 = int_to_ptr.vmem [resolvable:$true] %s556
          %559 = dma.vmem_to_hbm [thread:$0]  %s557, 16, %s554, %s524
        $region76: #{tpu_custom_call.1} parent=47 // pred_fallthru
          _
        // Predicated region
        $region77: #{tpu_custom_call.1} parent=47 // pred_check
          %p560 = pneg %p277
        $region78: #{tpu_custom_call.1} parent=47 // pred_check_branch
          %562 = sbr.rel (%p560) target = $region80
        $region79: #{tpu_custom_call.1} parent=47 // pred_region
          %s564 = ssub.s32 16, 16
          %565 = vsyncadd %s528, %s564
          %s566 = smul.addr %s35, 16
          %s567 = scalar_lea.hbm %s9, %s566
          %s569 = sshll.u32 %s530, 4
          %s570 = int_to_ptr.vmem [resolvable:$true] %s569
          %572 = dma.vmem_to_hbm [thread:$0]  %s570, 16, %s567, %s528
        $region80: #{tpu_custom_call.1} parent=47 // pred_fallthru
          _
      $region48: #{tpu_custom_call.1} parent=5 // pred_fallthru
        _
      %p573 = scmp.le.s32.totalorder 2, %s25
      // Predicated region
      $region81: #{tpu_custom_call.1} parent=5 // pred_check
        %p574 = pneg %p573
      $region82: #{tpu_custom_call.1} parent=5 // pred_check_branch
        %576 = sbr.rel (%p574) target = $region84
      $region83: #{tpu_custom_call.1} parent=5 // pred_region
        %s577 = ssub.s32 %s25, 2
        // Predicated region
        $region85: #{tpu_custom_call.1} parent=83 // pred_check
          %p578 = pneg %p231
        $region86: #{tpu_custom_call.1} parent=83 // pred_check_branch
          %580 = sbr.rel (%p578) target = $region88
        $region87: #{tpu_custom_call.1} parent=83 // pred_region
          %s581 = sand.u32 %s216, 1
          %s582 = scalar_lea.sflag [#allocation8], %s581
          %s583 = sand.u32 %s216, 1
          %s584 = smul.addr %s583, 4
          %s585 = scalar_lea.vmem [#allocation9], %s584
          %586 = dma.done %s582, 64
        $region88: #{tpu_custom_call.1} parent=83 // pred_fallthru
          _
        // Predicated region
        $region89: #{tpu_custom_call.1} parent=83 // pred_check
          %p587 = pneg %p257
        $region90: #{tpu_custom_call.1} parent=83 // pred_check_branch
          %589 = sbr.rel (%p587) target = $region92
        $region91: #{tpu_custom_call.1} parent=83 // pred_region
          %s590 = sand.u32 %s31, 1
          %s591 = scalar_lea.sflag [#allocation11], %s590
          %s592 = sand.u32 %s242, 1
          %s593 = scalar_lea.vmem [#allocation10], %s592
          %594 = dma.done %s591, 16
        $region92: #{tpu_custom_call.1} parent=83 // pred_fallthru
          _
        // Predicated region
        $region93: #{tpu_custom_call.1} parent=83 // pred_check
          %p595 = pneg %p283
        $region94: #{tpu_custom_call.1} parent=83 // pred_check_branch
          %597 = sbr.rel (%p595) target = $region96
        $region95: #{tpu_custom_call.1} parent=83 // pred_region
          %s598 = sand.u32 %s31, 1
          %s599 = scalar_lea.sflag [#allocation11], %s598
          %s600 = sand.u32 %s268, 1
          %s601 = scalar_lea.vmem [#allocation12], %s600
          %602 = dma.done %s599, 16
        $region96: #{tpu_custom_call.1} parent=83 // pred_fallthru
          _
      $region84: #{tpu_custom_call.1} parent=5 // pred_fallthru
        _
    $region6: #{tpu_custom_call.1} parent=1 // loop_footer
      %s29 = sadd.s32 1, %s25
    $region7: #{tpu_custom_call.1} parent=1 // loop_footer_branch
      %24 = sbr.rel target = $region3
    $region8: #{tpu_custom_call.1} parent=1 // loop_exit
      _
    %603 = vsyncpa [#allocation7], 1
    %s604 = scalar_lea.sflag [#allocation7], 1
    %605 = vsyncpa %s604, 1
    %606 = vsyncpa [#allocation8], 1
    %s607 = scalar_lea.sflag [#allocation8], 1
    %608 = vsyncpa %s607, 1
    %609 = vsyncpa [#allocation11], 1
    %s610 = scalar_lea.sflag [#allocation11], 1
    %611 = vsyncpa %s610, 1

</llo_original>
